<compile_context>
chip_gen: v6e
topology: v6e:2x2x1
jax: 0.10.0
libtpu: 0.0.40
codegen_flags: <defaults>
</compile_context>

<pallas_src>
from functools import partial

import jax
import jax.numpy as jnp
import numpy as np
from jax.experimental import pallas as pl
from jax.experimental.pallas import tpu as pltpu


# ----------------------------- glue (plain JAX) -----------------------------

def n_features_for_freq(n_freqs: int) -> int:
    return n_freqs * 2 + 1


def pos_encode_feature(x, domain, n_freqs):
    # x: (T, 1)
    x = jnp.clip(x, -domain, domain)
    out = [x]
    for i in range(n_freqs):
        out.append(jnp.sin((2.0 ** i) * x))
        out.append(jnp.cos((2.0 ** i) * x))
    return jnp.concatenate(out, axis=-1)  # (T, F)


def pos_encoded_features(time_dim, n_freqs, domain=1.0):
    pos = jnp.linspace(-domain, domain, time_dim, dtype=jnp.float32).reshape(-1, 1)
    # inner call in the reference uses domain=1 regardless of outer domain
    return pos_encode_feature(pos, 1.0, n_freqs)  # (T, F)


# ------------------------------- Pallas kernel -------------------------------

def _residual_add_kernel(learned_ref, x_ref, o_ref):
    # learned_ref: (1, N)   -- precomputed Linear(pos) slab, flattened (T*C)
    # x_ref:       (TB, N)  -- row tile of the flattened input
    # o_ref:       (TB, N)  -- output tile = x + learned (broadcast over rows)
    o_ref[...] = x_ref[...] + learned_ref[...]


def _pick_row_tile(B, N, itemsize):
    """Largest row tile whose block stays under ~4 MiB (so 2 bufs x (in+out)
    blocks + slab stay well under the 32 MiB scoped VMEM default, portable to
    v7x's 64 MiB physical VMEM)."""
    target_block_bytes = 4 << 20
    rows = max(1, target_block_bytes // (N * itemsize))
    if rows >= B or B <= 8:
        return B                    # single block covers the full batch dim
    return max(8, (rows // 8) * 8)  # multiple-of-8 sublane rule; cdiv masks tail


_SMALL_BYTES_THRESHOLD = 4 << 20  # below this, XLA fusion beats custom-call overhead


@partial(jax.jit, static_argnames=("n_freqs", "force_pallas"), donate_argnums=0)
def learned_pos_encodings(x, weight, bias, *, n_freqs, force_pallas=False):
    """x: (B, T, C); weight: (C, F) (torch Linear layout); bias: (C,)."""
    B, T, C = x.shape
    F = n_features_for_freq(n_freqs)
    assert weight.shape == (C, F) and bias.shape == (C,)

    # Hoisted, batch-invariant work: pos features + tiny Linear, done once.
    pos = pos_encoded_features(T, n_freqs)                               # (T, F) f32
    learned = (pos @ weight.T.astype(jnp.float32)
               + bias.astype(jnp.float32))                               # (T, C) f32

    N = T * C
    total_bytes = B * N * x.dtype.itemsize
    if (not force_pallas) and total_bytes < _SMALL_BYTES_THRESHOLD:
        # Tiny tensors: custom-call + grid-step overhead dominates; let XLA fuse.
        return x + learned[None].astype(x.dtype)

    learned_flat = learned.astype(x.dtype).reshape(1, N)                 # (1, N) resident slab
    x_flat = x.reshape(B, N)                                             # lane-dense last dim

    tb = _pick_row_tile(B, N, x.dtype.itemsize)
    grid = (pl.cdiv(B, tb),)

    out_flat = pl.pallas_call(
        _residual_add_kernel,
        out_shape=jax.ShapeDtypeStruct((B, N), x.dtype),
        grid=grid,
        in_specs=[
            pl.BlockSpec((1, N), lambda i: (0, 0)),    # learned slab (stays resident)
            pl.BlockSpec((tb, N), lambda i: (i, 0)),   # x row tile (pipelined)
        ],
        out_specs=pl.BlockSpec((tb, N), lambda i: (i, 0)),
        input_output_aliases={1: 0},                   # in-place over donated x
        compiler_params=pltpu.CompilerParams(
            dimension_semantics=("parallel",),         # v7x: shard rows over 2 TCs
            vmem_limit_bytes=32 << 20,                 # tile sized against this limit
        ),
    )(learned_flat, x_flat)

    return out_flat.reshape(B, T, C)


# --------------------------------- reference ---------------------------------

def _reference(x, weight, bias, n_freqs):
    pos = pos_encoded_features(x.shape[1], n_freqs)                      # (T, F)
    learned = pos @ weight.T + bias                                      # (T, C)
    return x + learned[None, :, :]


# ----------------------------------- main ------------------------------------

if __name__ == "__main__":
    n_freqs = 4
    out_channels = 32
    batch, time_dim = 2, 16
    F = n_features_for_freq(n_freqs)

    key = jax.random.PRNGKey(0)
    kx, kw, kb = jax.random.split(key, 3)

    x = jax.random.normal(kx, (batch, time_dim, out_channels), dtype=jnp.float32)

    # Deterministic parameter init (mimics torch Linear's uniform(-1/sqrt(F), 1/sqrt(F)))
    bound = 1.0 / np.sqrt(F)
    weight = jax.random.uniform(kw, (out_channels, F), minval=-bound, maxval=bound,
                                dtype=jnp.float32)
    bias = jax.random.uniform(kb, (out_channels,), minval=-bound, maxval=bound,
                              dtype=jnp.float32)

    # Reference first: x is donated to the kernel call, so use it before that.
    ref = _reference(x, weight, bias, n_freqs)
    ref = jax.block_until_ready(ref)

    # force_pallas=True so the demo-scale input still exercises the kernel path.
    out = learned_pos_encodings(x, weight, bias, n_freqs=n_freqs, force_pallas=True)
    out = jax.block_until_ready(out)

    np.testing.assert_allclose(np.asarray(out), np.asarray(ref), rtol=1e-5, atol=1e-5)

    print("KERNEL_OK")
</pallas_src>

<mosaic_0001>
module attributes {stable_mosaic.version = 11 : i64} {
  func.func @_residual_add_kernel(%arg0: i32, %arg1: memref<1x512xf32, #tpu.memory_space<vmem>>, %arg2: memref<2x512xf32, #tpu.memory_space<vmem>>, %arg3: memref<2x512xf32, #tpu.memory_space<vmem>>) attributes {dimension_semantics = [#tpu.dimension_semantics<parallel>], iteration_bounds = array<i64: 1>, scalar_prefetch = 0 : i64, scratch_operands = 0 : i64, tpu.core_type = #tpu.core_type<tc>, window_params = [{pipeline_mode = #tpu.pipeline_mode<synchronous>, transform_indices = @transform_0, window_bounds = array<i64: 1, 512>}, {transform_indices = @transform_1, window_bounds = array<i64: 2, 512>}, {transform_indices = @transform_2, window_bounds = array<i64: 2, 512>}]} {
    %c0 = arith.constant 0 : index
    %c0_0 = arith.constant 0 : index
    %0 = vector.load %arg2[%c0, %c0_0] : memref<2x512xf32, #tpu.memory_space<vmem>>, vector<2x512xf32>
    %c0_1 = arith.constant 0 : index
    %c0_2 = arith.constant 0 : index
    %1 = vector.load %arg1[%c0_1, %c0_2] : memref<1x512xf32, #tpu.memory_space<vmem>>, vector<1x512xf32>
    %2 = vector.broadcast %1 : vector<1x512xf32> to vector<2x512xf32>
    %3 = arith.addf %0, %2 : vector<2x512xf32>
    %c0_3 = arith.constant 0 : index
    %c0_4 = arith.constant 0 : index
    %4 = vector.load %arg3[%c0_3, %c0_4] : memref<2x512xf32, #tpu.memory_space<vmem>>, vector<2x512xf32>
    tpu.vector_store %arg3[%c0_3, %c0_4], %3 {strides = array<i32>} : memref<2x512xf32, #tpu.memory_space<vmem>>, vector<2x512xf32>,
    return
  }
  func.func @transform_0(%arg0: i32) -> (i32, i32) {
    %c0_i32 = arith.constant 0 : i32
    %c0_i32_0 = arith.constant 0 : i32
    %c0_i32_1 = arith.constant 0 : i32
    return %c0_i32, %c0_i32_0 : i32, i32
  }
  func.func @transform_1(%arg0: i32) -> (i32, i32) {
    %c0_i32 = arith.constant 0 : i32
    %c0_i32_0 = arith.constant 0 : i32
    return %arg0, %c0_i32 : i32, i32
  }
  func.func @transform_2(%arg0: i32) -> (i32, i32) {
    %c0_i32 = arith.constant 0 : i32
    %c0_i32_0 = arith.constant 0 : i32
    return %arg0, %c0_i32 : i32, i32
  }
}

</mosaic_0001>

<llo_original>
// kernel: learned_pos_encodings.1
$region0: #{learned_pos_encodings.1}
  #allocation0 [shape = 'u32[]', space=smem, size = 0x4, offset = 0x4, fixed_abs, tag = 'smem constant byte address 0x4 - core index']
  #allocation1 [shape = 'u32[144,128]{1,0:T(1,128)}', space=vmem, size = 0x12000, scoped, tag = 'internal scratch']
  %s0 = inlined_call_operand.vmem [shape: f32[1,512], index: 0, kind: input, shape index: {}]
  %s1 = inlined_call_operand.vmem [shape: f32[2,512], index: 1, kind: input, shape index: {}, may-alias: {1,2}]
  %s2 = inlined_call_operand.vmem [shape: f32[2,512], index: 2, kind: output, shape index: {}, may-alias: {1,2}]
  %s3 = sld [smem:[#allocation0]]
  $region18: #{learned_pos_encodings.1} parent=0
    _
  %s5 = ssub.s32 1, %s3
  %s6 = scalar_select 0, %s5, %s3
  // Predicated region
  $region2: #{learned_pos_encodings.1} parent=0 // pred_check
    _
  $region3: #{learned_pos_encodings.1} parent=0 // pred_check_branch
    %8 = sbr.rel (0) target = $region5
  $region4: #{learned_pos_encodings.1} parent=0 // pred_region
    _
  $region5: #{learned_pos_encodings.1} parent=0 // pred_fallthru
    _
  // Predicated region
  $region6: #{learned_pos_encodings.1} parent=0 // pred_check
    _
  $region7: #{learned_pos_encodings.1} parent=0 // pred_check_branch
    %10 = sbr.rel (0) target = $region9
  $region8: #{learned_pos_encodings.1} parent=0 // pred_region
    _
  $region9: #{learned_pos_encodings.1} parent=0 // pred_fallthru
    _
  %v11 = vld [vmem:[%s1] sm:$0xff]
  %v12 = vld [vmem:[%s0] sm:$0xf]
  %v14 = vlaneseq
  %v15 = vshrl.u32 %v14, 7
  %v16 = vsub.s32 0, %v15
  %v17 = vrot.slane %v12, %v16
  %v18 = vlaneseq
  %v19 = vshrl.u32 %v18, 7
  %v20 = vsub.s32 1, %v19
  %v21 = vrot.slane %v12, %v20
  %v22 = vlaneseq
  %v23 = vshrl.u32 %v22, 7
  %v24 = vsub.s32 2, %v23
  %v25 = vrot.slane %v12, %v24
  %v26 = vlaneseq
  %v27 = vshrl.u32 %v26, 7
  %v28 = vsub.s32 3, %v27
  %v29 = vrot.slane %v12, %v28
  %v30 = vcombine.low %v17, %v21
  %v31 = vcombine.low %v25, %v29
  %v33 = vunpack.c.l.s4 1983009808
  %v34 = vunpack.c.0.s8 %v33
  %v35 = vlaneseq
  %v36 = vshrl.u32 %v35, 7
  %v37 = vsub.s32 %v34, %v36
  %v38 = vrot.slane %v30, %v37
  %v40 = vunpack.c.l.s4 1983009808
  %v41 = vunpack.c.0.s8 %v40
  %v42 = vlaneseq
  %v43 = vshrl.u32 %v42, 7
  %v44 = vsub.s32 %v41, %v43
  %v45 = vrot.slane %v31, %v44
  %v46 = vcombine.low %v38, %v45
  %v48 = vadd.f32 %v11, %v46
  %49 = vst [vmem:[%s2] sm:$0xff] %v48
  // Predicated region
  $region10: #{learned_pos_encodings.1} parent=0 // pred_check
    _
  $region11: #{learned_pos_encodings.1} parent=0 // pred_check_branch
    %51 = sbr.rel (0) target = $region13
  $region12: #{learned_pos_encodings.1} parent=0 // pred_region
    _
  $region13: #{learned_pos_encodings.1} parent=0 // pred_fallthru
    _
  // Predicated region
  $region14: #{learned_pos_encodings.1} parent=0 // pred_check
    _
  $region15: #{learned_pos_encodings.1} parent=0 // pred_check_branch
    %53 = sbr.rel (0) target = $region17
  $region16: #{learned_pos_encodings.1} parent=0 // pred_region
    _
  $region17: #{learned_pos_encodings.1} parent=0 // pred_fallthru
    _

</llo_original>
